<compile_context>
chip_gen: v7x
topology: tpu7x:2x2x1
jax: 0.10.0
libtpu: 0.0.40
codegen_flags: <defaults>
</compile_context>

<pallas_src>
import numpy as np
import jax
import jax.numpy as jnp
from jax.experimental import pallas as pl
from jax.experimental.pallas import tpu as pltpu


# ----------------------------------------------------------------------------
# Parameter construction (matches GaussianLayer.gaussian_kernel: scipy.ndimage.
# gaussian_filter applied to a centered delta, mode='reflect').  gaussian_filter
# is separable, so the 3-D kernel is the outer product of per-axis 1-D taps.
# ----------------------------------------------------------------------------
def _gaussian_filtered_delta_1d(size, sigma, truncate=4.0):
    delta = np.zeros(size, dtype=np.float64)
    delta[size // 2] = 1.0
    if sigma <= 0:
        # sigma=0 -> identity filter; matches scipy AND the module's default
        # sigma = kernel_size // 6 (integer division), which is 0 for size 5.
        return delta
    radius = int(truncate * float(sigma) + 0.5)
    x = np.arange(-radius, radius + 1, dtype=np.float64)
    w = np.exp(-0.5 * (x / float(sigma)) ** 2)
    w /= w.sum()
    padded = np.pad(delta, radius, mode="symmetric")  # scipy 'reflect' == numpy 'symmetric'
    return np.correlate(padded, w, mode="valid")


def gaussian_taps_1d(kernel_size=(5, 5, 5), sigma=(1.0, 1.0, 1.0)):
    return [_gaussian_filtered_delta_1d(k, s) for k, s in zip(kernel_size, sigma)]


def gaussian_kernel_3d(kernel_size=(5, 5, 5), sigma=(1.0, 1.0, 1.0)):
    g = gaussian_taps_1d(kernel_size, sigma)
    return np.einsum("i,j,k->ijk", g[0], g[1], g[2]).astype(np.float32)


def _round_up(x, m):
    return (x + m - 1) // m * m


# ----------------------------------------------------------------------------
# Pallas kernel
# ----------------------------------------------------------------------------
def _build_kernel(TD, HWp, W, taps_d, taps_h, taps_w):
    KD = len(taps_d)
    pd_lo, pd_hi = KD // 2, KD - KD // 2 - 1
    ph_lo, pw_lo = len(taps_h) // 2, len(taps_w) // 2
    # Rows whose roll-based D-pass result wraps around the slab -> recomputed
    # exactly from the halo blocks (at most pd_lo + pd_hi rows).
    fix_rows = sorted(set(range(min(pd_lo, TD))) | set(range(max(TD - pd_hi, 0), TD)))

    def kernel(cur_ref, prev_ref, next_ref, mwh_ref, mww_ref, o_ref, acc_ref):
        d = pl.program_id(1)
        x = cur_ref[0].astype(jnp.float32)                      # (TD, HWp)

        # ---- D pass: KD scalar-weighted sublane rolls (no concat, no slices) ----
        acc = None
        for t, wt in enumerate(taps_d):
            if wt == 0.0:
                continue
            s = t - pd_lo
            src = x if s == 0 else pltpu.roll(x, (-s) % TD, axis=0)
            term = float(wt) * src
            acc = term if acc is None else acc + term
        acc_ref[...] = acc

        # Boundary rows: exact recompute using the neighbouring slabs' 8-row halos.
        # Halo contributions are zero-scaled at the volume edges == zero padding.
        if fix_rows:
            prev_ok = jnp.where(d > 0, 1.0, 0.0)
            next_ok = jnp.where(d < pl.num_programs(1) - 1, 1.0, 0.0)
            prev = prev_ref[0].astype(jnp.float32) * prev_ok    # (8, HWp)
            nxt = next_ref[0].astype(jnp.float32) * next_ok     # (8, HWp)
            for r in fix_rows:
                row = None
                for t, wt in enumerate(taps_d):
                    if wt == 0.0:
                        continue
                    q = r + (t - pd_lo)
                    if q < 0:                       # row lives in the previous slab
                        src_row = prev[8 + q: 9 + q]
                    elif q >= TD:                   # row lives in the next slab
                        src_row = nxt[q - TD: q - TD + 1]
                    else:
                        src_row = x[q: q + 1]
                    term = float(wt) * src_row
                    row = term if row is None else row + term
                acc_ref[pl.ds(r, 1), :] = row

        y = acc_ref[...]                                        # (TD, HWp) f32

        # ---- H pass: lane rolls x folded (tap weight * zero-pad mask) rows ----
        acc = None
        for t, wt in enumerate(taps_h):
            if wt == 0.0:
                continue
            shift = (-(t - ph_lo) * W) % HWp
            src = y if shift == 0 else pltpu.roll(y, shift, axis=1)
            term = src * mwh_ref[t]                             # (TD,HWp)*(1,HWp)
            acc = term if acc is None else acc + term
        y = acc

        # ---- W pass: single-lane shifts, masked at each W-row edge ----
        acc = None
        for t, wt in enumerate(taps_w):
            if wt == 0.0:
                continue
            shift = (-(t - pw_lo)) % HWp
            src = y if shift == 0 else pltpu.roll(y, shift, axis=1)
            term = src * mww_ref[t]
            acc = term if acc is None else acc + term

        o_ref[0] = acc.astype(o_ref.dtype)

    return kernel


def _choose_block_depth(D, HWp):
    # Target ~4 MiB for the f32 working tile: with double-buffered in/out blocks,
    # the two 8-row halo blocks and the f32 scratch this stays well under the
    # scoped-VMEM budget on every generation (v7x: 64 MiB physical).
    target = 4 * 1024 * 1024
    td = max(8, (target // (HWp * 4)) // 8 * 8)
    return int(min(td, _round_up(D, 8)))


def gaussian_layer_forward_4d(x, kernel_size=(5, 5, 5), sigma=(1.0, 1.0, 1.0),
                              padding="same", block_depth=None):
    """Pallas forward of GaussianLayer for a 4-D (N, D, H, W) input."""
    N, D, H, W = x.shape
    taps = gaussian_taps_1d(kernel_size, sigma)
    taps_d, taps_h, taps_w = ([float(v) for v in t] for t in taps)
    KD, KH, KW = len(taps_d), len(taps_h), len(taps_w)
    if max(KD // 2, KD - KD // 2 - 1) > 8:
        raise NotImplementedError("depth kernel_size > 17 needs a deeper halo block")

    HW = H * W
    HWp = _round_up(HW, 128)                 # lane-dense (unmasked vst) blocks
    TD = block_depth if block_depth is not None else _choose_block_depth(D, HWp)
    TD = max(8, (int(TD) // 8) * 8)
    TD = min(TD, _round_up(D, 8))
    Dp = _round_up(D, TD)                    # zero rows below D == 'same' zero pad
    nd = Dp // TD
    r8, d8 = TD // 8, Dp // 8

    x3 = x.reshape(N, D, HW)
    if (Dp, HWp) != (D, HW):
        x3 = jnp.pad(x3, ((0, 0), (0, Dp - D), (0, HWp - HW)))

    # Compile-time folded (tap weight x zero-pad validity) rows for the lane passes.
    lane = np.arange(HWp)
    mwh = np.zeros((KH, 1, HWp), np.float32)
    for t, wt in enumerate(taps_h):
        src = lane + (t - KH // 2) * W
        mwh[t, 0] = np.float32(wt) * ((src >= 0) & (src < HW))
    mww = np.zeros((KW, 1, HWp), np.float32)
    w_in_row = lane % W
    for t, wt in enumerate(taps_w):
        src = w_in_row + (t - KW // 2)
        mww[t, 0] = np.float32(wt) * ((src >= 0) & (src < W))
    mwh, mww = jnp.asarray(mwh), jnp.asarray(mww)

    kernel = _build_kernel(TD, HWp, W, taps_d, taps_h, taps_w)

    itemsize = x.dtype.itemsize
    est = (2 * TD * HWp * itemsize            # current slab (double buffered)
           + 2 * 2 * 8 * HWp * itemsize       # prev/next 8-row halo blocks
           + 2 * TD * HWp * itemsize          # output slab
           + TD * HWp * 4                     # f32 scratch accumulator
           + (KH + KW) * HWp * 4)             # folded tap/mask tables
    vmem_limit = int(min(max(est + (16 << 20), 32 << 20), 56 << 20))

    out = pl.pallas_call(
        kernel,
        out_shape=jax.ShapeDtypeStruct((N, Dp, HWp), x.dtype),
        grid=(N, nd),
        in_specs=[
            pl.BlockSpec((1, TD, HWp), lambda n, d: (n, d, 0)),
            # 8-row halo just above / below the current slab (index clamped at the
            # volume edges; the kernel zero-scales those contributions).
            pl.BlockSpec((1, 8, HWp), lambda n, d: (n, jnp.maximum(d * r8 - 1, 0), 0)),
            pl.BlockSpec((1, 8, HWp), lambda n, d: (n, jnp.minimum((d + 1) * r8, d8 - 1), 0)),
            pl.BlockSpec((KH, 1, HWp), lambda n, d: (0, 0, 0)),
            pl.BlockSpec((KW, 1, HWp), lambda n, d: (0, 0, 0)),
        ],
        out_specs=pl.BlockSpec((1, TD, HWp), lambda n, d: (n, d, 0)),
        scratch_shapes=[pltpu.VMEM((TD, HWp), jnp.float32)],
        compiler_params=pltpu.CompilerParams(
            dimension_semantics=("parallel", "parallel"),  # megacore shards N / D-slabs
            vmem_limit_bytes=vmem_limit),
    )(x3, x3, x3, mwh, mww)

    out = out[:, :D, :HW].reshape(N, D, H, W)

    if padding == "valid":
        # 'valid' conv == interior crop of the 'same' result (zero pad never touched there).
        out = out[:, KD // 2: D - (KD - KD // 2 - 1),
                     KH // 2: H - (KH - KH // 2 - 1),
                     KW // 2: W - (KW - KW // 2 - 1)]
    return out


def gaussian_layer(x, kernel_size=5, sigma=None, padding="same"):
    """Module-faithful entry point: handles 2-D/3-D/4-D inputs like expand_dims/squeeze."""
    if isinstance(kernel_size, int):
        kernel_size = (kernel_size,) * 3
    if sigma is None:
        # Matches the torch module exactly: numpy integer division (kernel_size // 6),
        # so the default kernel_size=5 yields sigma=0 (identity filter).
        sigma = tuple(k // 6 for k in kernel_size)
    elif isinstance(sigma, (int, float)):
        sigma = (float(sigma),) * 3

    ndim = x.ndim
    if ndim == 2:
        xv = x[None, None]
    elif ndim == 3:
        xv = x[None]
    elif ndim == 4:
        xv = x
    else:
        raise ValueError(f"unsupported ndim={ndim}")
    out = gaussian_layer_forward_4d(xv, kernel_size, sigma, padding)
    if ndim == 2:
        return out[0, 0]
    if ndim == 3:
        return out[0]
    return out


# ----------------------------------------------------------------------------
# Pure-JAX reference (F.pad + F.conv3d semantics) for the correctness check
# ----------------------------------------------------------------------------
def reference_forward(x, kernel_3d):
    xe = x[:, None].astype(jnp.float32)                        # (N, 1, D, H, W)
    k = jnp.asarray(kernel_3d, jnp.float32)[None, None]        # (1, 1, KD, KH, KW)
    pads = [(kk // 2, kk - kk // 2 - 1) for kk in kernel_3d.shape]
    out = jax.lax.conv_general_dilated(
        xe, k, window_strides=(1, 1, 1), padding=pads,
        dimension_numbers=("NCDHW", "OIDHW", "NCDHW"))
    return out[:, 0].astype(x.dtype)


if __name__ == "__main__":
    kernel_size = (5, 5, 5)
    sigma = (1.0, 1.0, 1.0)
    ref_k = gaussian_kernel_3d(kernel_size, sigma)
    key1, key2 = jax.random.split(jax.random.PRNGKey(0))

    # Case 1: (8, 128)-aligned shapes (H*W = 256), single depth slab per batch.
    x1 = jax.random.normal(key1, (2, 8, 16, 16), dtype=jnp.float32)
    out1 = jax.block_until_ready(gaussian_layer_forward_4d(x1, kernel_size, sigma))
    ref1 = jax.block_until_ready(reference_forward(x1, ref_k))
    np.testing.assert_allclose(np.asarray(out1), np.asarray(ref1), rtol=1e-5, atol=1e-5)

    # Case 2: unaligned H*W (lane padding) + multiple depth slabs (halo path).
    x2 = jax.random.normal(key2, (1, 20, 12, 16), dtype=jnp.float32)
    out2 = jax.block_until_ready(
        gaussian_layer_forward_4d(x2, kernel_size, sigma, block_depth=8))
    ref2 = jax.block_until_ready(reference_forward(x2, ref_k))
    np.testing.assert_allclose(np.asarray(out2), np.asarray(ref2), rtol=1e-5, atol=1e-5)

    print("KERNEL_OK")
</pallas_src>

<mosaic_0001>
module attributes {stable_mosaic.version = 11 : i64} {
  func.func @kernel(%arg0: i32, %arg1: i32, %arg2: memref<1x8x256xf32, #tpu.memory_space<vmem>>, %arg3: memref<1x8x256xf32, #tpu.memory_space<vmem>>, %arg4: memref<1x8x256xf32, #tpu.memory_space<vmem>>, %arg5: memref<5x1x256xf32, #tpu.memory_space<vmem>>, %arg6: memref<5x1x256xf32, #tpu.memory_space<vmem>>, %arg7: memref<1x8x256xf32, #tpu.memory_space<vmem>>, %arg8: memref<8x256xf32, #tpu.memory_space<vmem>>) attributes {dimension_semantics = [#tpu.dimension_semantics<parallel>, #tpu.dimension_semantics<parallel>], iteration_bounds = array<i64: 2, 1>, scalar_prefetch = 0 : i64, scratch_operands = 1 : i64, tpu.core_type = #tpu.core_type<tc>, window_params = [{transform_indices = @transform_0, window_bounds = array<i64: 1, 8, 256>}, {transform_indices = @transform_1, window_bounds = array<i64: 1, 8, 256>}, {transform_indices = @transform_2, window_bounds = array<i64: 1, 8, 256>}, {pipeline_mode = #tpu.pipeline_mode<synchronous>, transform_indices = @transform_3, window_bounds = array<i64: 5, 1, 256>}, {pipeline_mode = #tpu.pipeline_mode<synchronous>, transform_indices = @transform_4, window_bounds = array<i64: 5, 1, 256>}, {transform_indices = @transform_5, window_bounds = array<i64: 1, 8, 256>}]} {
    %c0 = arith.constant 0 : index
    %c0_0 = arith.constant 0 : index
    %c0_1 = arith.constant 0 : index
    %0 = vector.load %arg2[%c0, %c0_0, %c0_1] : memref<1x8x256xf32, #tpu.memory_space<vmem>>, vector<1x8x256xf32>
    %1 = vector.shape_cast %0 : vector<1x8x256xf32> to vector<8x256xf32>
    %c2_i32 = arith.constant 2 : i32
    %2 = tpu.dynamic_rotate %1 by %c2_i32 dim 0 : vector<8x256xf32>, i32 -> vector<8x256xf32>
    %cst = arith.constant 0.0584229901 : f32
    %3 = vector.broadcast %cst : f32 to vector<8x256xf32>
    %4 = arith.mulf %3, %2 : vector<8x256xf32>
    %c1_i32 = arith.constant 1 : i32
    %5 = tpu.dynamic_rotate %1 by %c1_i32 dim 0 : vector<8x256xf32>, i32 -> vector<8x256xf32>
    %cst_2 = arith.constant 0.242105275 : f32
    %6 = vector.broadcast %cst_2 : f32 to vector<8x256xf32>
    %7 = arith.mulf %6, %5 : vector<8x256xf32>
    %8 = arith.addf %4, %7 : vector<8x256xf32>
    %cst_3 = arith.constant 0.398943484 : f32
    %9 = vector.broadcast %cst_3 : f32 to vector<8x256xf32>
    %10 = arith.mulf %9, %1 : vector<8x256xf32>
    %11 = arith.addf %8, %10 : vector<8x256xf32>
    %c7_i32 = arith.constant 7 : i32
    %12 = tpu.dynamic_rotate %1 by %c7_i32 dim 0 : vector<8x256xf32>, i32 -> vector<8x256xf32>
    %cst_4 = arith.constant 0.242105275 : f32
    %13 = vector.broadcast %cst_4 : f32 to vector<8x256xf32>
    %14 = arith.mulf %13, %12 : vector<8x256xf32>
    %15 = arith.addf %11, %14 : vector<8x256xf32>
    %c6_i32 = arith.constant 6 : i32
    %16 = tpu.dynamic_rotate %1 by %c6_i32 dim 0 : vector<8x256xf32>, i32 -> vector<8x256xf32>
    %cst_5 = arith.constant 0.0584229901 : f32
    %17 = vector.broadcast %cst_5 : f32 to vector<8x256xf32>
    %18 = arith.mulf %17, %16 : vector<8x256xf32>
    %19 = arith.addf %15, %18 : vector<8x256xf32>
    %c0_6 = arith.constant 0 : index
    %c0_7 = arith.constant 0 : index
    %20 = vector.load %arg8[%c0_6, %c0_7] : memref<8x256xf32, #tpu.memory_space<vmem>>, vector<8x256xf32>
    tpu.vector_store %arg8[%c0_6, %c0_7], %19 {strides = array<i32>} : memref<8x256xf32, #tpu.memory_space<vmem>>, vector<8x256xf32>,
    %c0_i32 = arith.constant 0 : i32
    %21 = arith.cmpi sgt, %arg1, %c0_i32 : i32
    %cst_8 = arith.constant 1.000000e+00 : f32
    %cst_9 = arith.constant 0.000000e+00 : f32
    %22 = arith.select %21, %cst_8, %cst_9 : f32
    %c0_i32_10 = arith.constant 0 : i32
    %23 = arith.cmpi slt, %arg1, %c0_i32_10 : i32
    %cst_11 = arith.constant 1.000000e+00 : f32
    %cst_12 = arith.constant 0.000000e+00 : f32
    %24 = arith.select %23, %cst_11, %cst_12 : f32
    %c0_13 = arith.constant 0 : index
    %c0_14 = arith.constant 0 : index
    %c0_15 = arith.constant 0 : index
    %25 = vector.load %arg3[%c0_13, %c0_14, %c0_15] : memref<1x8x256xf32, #tpu.memory_space<vmem>>, vector<1x8x256xf32>
    %26 = vector.shape_cast %25 : vector<1x8x256xf32> to vector<8x256xf32>
    %27 = vector.broadcast %22 : f32 to vector<8x256xf32>
    %28 = arith.mulf %26, %27 : vector<8x256xf32>
    %c0_16 = arith.constant 0 : index
    %c0_17 = arith.constant 0 : index
    %c0_18 = arith.constant 0 : index
    %29 = vector.load %arg4[%c0_16, %c0_17, %c0_18] : memref<1x8x256xf32, #tpu.memory_space<vmem>>, vector<1x8x256xf32>
    %30 = vector.shape_cast %29 : vector<1x8x256xf32> to vector<8x256xf32>
    %31 = vector.broadcast %24 : f32 to vector<8x256xf32>
    %32 = arith.mulf %30, %31 : vector<8x256xf32>
    %33 = vector.extract_strided_slice %28 {offsets = [6, 0], sizes = [1, 256], strides = [1, 1]} : vector<8x256xf32> to vector<1x256xf32>
    %cst_19 = arith.constant 0.0584229901 : f32
    %34 = vector.broadcast %cst_19 : f32 to vector<1x256xf32>
    %35 = arith.mulf %34, %33 : vector<1x256xf32>
    %36 = vector.extract_strided_slice %28 {offsets = [7, 0], sizes = [1, 256], strides = [1, 1]} : vector<8x256xf32> to vector<1x256xf32>
    %cst_20 = arith.constant 0.242105275 : f32
    %37 = vector.broadcast %cst_20 : f32 to vector<1x256xf32>
    %38 = arith.mulf %37, %36 : vector<1x256xf32>
    %39 = arith.addf %35, %38 : vector<1x256xf32>
    %40 = vector.extract_strided_slice %1 {offsets = [0, 0], sizes = [1, 256], strides = [1, 1]} : vector<8x256xf32> to vector<1x256xf32>
    %cst_21 = arith.constant 0.398943484 : f32
    %41 = vector.broadcast %cst_21 : f32 to vector<1x256xf32>
    %42 = arith.mulf %41, %40 : vector<1x256xf32>
    %43 = arith.addf %39, %42 : vector<1x256xf32>
    %44 = vector.extract_strided_slice %1 {offsets = [1, 0], sizes = [1, 256], strides = [1, 1]} : vector<8x256xf32> to vector<1x256xf32>
    %cst_22 = arith.constant 0.242105275 : f32
    %45 = vector.broadcast %cst_22 : f32 to vector<1x256xf32>
    %46 = arith.mulf %45, %44 : vector<1x256xf32>
    %47 = arith.addf %43, %46 : vector<1x256xf32>
    %48 = vector.extract_strided_slice %1 {offsets = [2, 0], sizes = [1, 256], strides = [1, 1]} : vector<8x256xf32> to vector<1x256xf32>
    %cst_23 = arith.constant 0.0584229901 : f32
    %49 = vector.broadcast %cst_23 : f32 to vector<1x256xf32>
    %50 = arith.mulf %49, %48 : vector<1x256xf32>
    %51 = arith.addf %47, %50 : vector<1x256xf32>
    %c0_24 = arith.constant 0 : index
    %c0_25 = arith.constant 0 : index
    %52 = vector.load %arg8[%c0_24, %c0_25] : memref<8x256xf32, #tpu.memory_space<vmem>>, vector<1x256xf32>
    tpu.vector_store %arg8[%c0_24, %c0_25], %51 {strides = array<i32>} : memref<8x256xf32, #tpu.memory_space<vmem>>, vector<1x256xf32>,
    %53 = vector.extract_strided_slice %28 {offsets = [7, 0], sizes = [1, 256], strides = [1, 1]} : vector<8x256xf32> to vector<1x256xf32>
    %cst_26 = arith.constant 0.0584229901 : f32
    %54 = vector.broadcast %cst_26 : f32 to vector<1x256xf32>
    %55 = arith.mulf %54, %53 : vector<1x256xf32>
    %56 = vector.extract_strided_slice %1 {offsets = [0, 0], sizes = [1, 256], strides = [1, 1]} : vector<8x256xf32> to vector<1x256xf32>
    %cst_27 = arith.constant 0.242105275 : f32
    %57 = vector.broadcast %cst_27 : f32 to vector<1x256xf32>
    %58 = arith.mulf %57, %56 : vector<1x256xf32>
    %59 = arith.addf %55, %58 : vector<1x256xf32>
    %60 = vector.extract_strided_slice %1 {offsets = [1, 0], sizes = [1, 256], strides = [1, 1]} : vector<8x256xf32> to vector<1x256xf32>
    %cst_28 = arith.constant 0.398943484 : f32
    %61 = vector.broadcast %cst_28 : f32 to vector<1x256xf32>
    %62 = arith.mulf %61, %60 : vector<1x256xf32>
    %63 = arith.addf %59, %62 : vector<1x256xf32>
    %64 = vector.extract_strided_slice %1 {offsets = [2, 0], sizes = [1, 256], strides = [1, 1]} : vector<8x256xf32> to vector<1x256xf32>
    %cst_29 = arith.constant 0.242105275 : f32
    %65 = vector.broadcast %cst_29 : f32 to vector<1x256xf32>
    %66 = arith.mulf %65, %64 : vector<1x256xf32>
    %67 = arith.addf %63, %66 : vector<1x256xf32>
    %68 = vector.extract_strided_slice %1 {offsets = [3, 0], sizes = [1, 256], strides = [1, 1]} : vector<8x256xf32> to vector<1x256xf32>
    %cst_30 = arith.constant 0.0584229901 : f32
    %69 = vector.broadcast %cst_30 : f32 to vector<1x256xf32>
    %70 = arith.mulf %69, %68 : vector<1x256xf32>
    %71 = arith.addf %67, %70 : vector<1x256xf32>
    %c1 = arith.constant 1 : index
    %c0_31 = arith.constant 0 : index
    %72 = vector.load %arg8[%c1, %c0_31] : memref<8x256xf32, #tpu.memory_space<vmem>>, vector<1x256xf32>
    tpu.vector_store %arg8[%c1, %c0_31], %71 {strides = array<i32>} : memref<8x256xf32, #tpu.memory_space<vmem>>, vector<1x256xf32>,
    %73 = vector.extract_strided_slice %1 {offsets = [4, 0], sizes = [1, 256], strides = [1, 1]} : vector<8x256xf32> to vector<1x256xf32>
    %cst_32 = arith.constant 0.0584229901 : f32
    %74 = vector.broadcast %cst_32 : f32 to vector<1x256xf32>
    %75 = arith.mulf %74, %73 : vector<1x256xf32>
    %76 = vector.extract_strided_slice %1 {offsets = [5, 0], sizes = [1, 256], strides = [1, 1]} : vector<8x256xf32> to vector<1x256xf32>
    %cst_33 = arith.constant 0.242105275 : f32
    %77 = vector.broadcast %cst_33 : f32 to vector<1x256xf32>
    %78 = arith.mulf %77, %76 : vector<1x256xf32>
    %79 = arith.addf %75, %78 : vector<1x256xf32>
    %80 = vector.extract_strided_slice %1 {offsets = [6, 0], sizes = [1, 256], strides = [1, 1]} : vector<8x256xf32> to vector<1x256xf32>
    %cst_34 = arith.constant 0.398943484 : f32
    %81 = vector.broadcast %cst_34 : f32 to vector<1x256xf32>
    %82 = arith.mulf %81, %80 : vector<1x256xf32>
    %83 = arith.addf %79, %82 : vector<1x256xf32>
    %84 = vector.extract_strided_slice %1 {offsets = [7, 0], sizes = [1, 256], strides = [1, 1]} : vector<8x256xf32> to vector<1x256xf32>
    %cst_35 = arith.constant 0.242105275 : f32
    %85 = vector.broadcast %cst_35 : f32 to vector<1x256xf32>
    %86 = arith.mulf %85, %84 : vector<1x256xf32>
    %87 = arith.addf %83, %86 : vector<1x256xf32>
    %88 = vector.extract_strided_slice %32 {offsets = [0, 0], sizes = [1, 256], strides = [1, 1]} : vector<8x256xf32> to vector<1x256xf32>
    %cst_36 = arith.constant 0.0584229901 : f32
    %89 = vector.broadcast %cst_36 : f32 to vector<1x256xf32>
    %90 = arith.mulf %89, %88 : vector<1x256xf32>
    %91 = arith.addf %87, %90 : vector<1x256xf32>
    %c6 = arith.constant 6 : index
    %c0_37 = arith.constant 0 : index
    %92 = vector.load %arg8[%c6, %c0_37] : memref<8x256xf32, #tpu.memory_space<vmem>>, vector<1x256xf32>
    tpu.vector_store %arg8[%c6, %c0_37], %91 {strides = array<i32>} : memref<8x256xf32, #tpu.memory_space<vmem>>, vector<1x256xf32>,
    %93 = vector.extract_strided_slice %1 {offsets = [5, 0], sizes = [1, 256], strides = [1, 1]} : vector<8x256xf32> to vector<1x256xf32>
    %cst_38 = arith.constant 0.0584229901 : f32
    %94 = vector.broadcast %cst_38 : f32 to vector<1x256xf32>
    %95 = arith.mulf %94, %93 : vector<1x256xf32>
    %96 = vector.extract_strided_slice %1 {offsets = [6, 0], sizes = [1, 256], strides = [1, 1]} : vector<8x256xf32> to vector<1x256xf32>
    %cst_39 = arith.constant 0.242105275 : f32
    %97 = vector.broadcast %cst_39 : f32 to vector<1x256xf32>
    %98 = arith.mulf %97, %96 : vector<1x256xf32>
    %99 = arith.addf %95, %98 : vector<1x256xf32>
    %100 = vector.extract_strided_slice %1 {offsets = [7, 0], sizes = [1, 256], strides = [1, 1]} : vector<8x256xf32> to vector<1x256xf32>
    %cst_40 = arith.constant 0.398943484 : f32
    %101 = vector.broadcast %cst_40 : f32 to vector<1x256xf32>
    %102 = arith.mulf %101, %100 : vector<1x256xf32>
    %103 = arith.addf %99, %102 : vector<1x256xf32>
    %104 = vector.extract_strided_slice %32 {offsets = [0, 0], sizes = [1, 256], strides = [1, 1]} : vector<8x256xf32> to vector<1x256xf32>
    %cst_41 = arith.constant 0.242105275 : f32
    %105 = vector.broadcast %cst_41 : f32 to vector<1x256xf32>
    %106 = arith.mulf %105, %104 : vector<1x256xf32>
    %107 = arith.addf %103, %106 : vector<1x256xf32>
    %108 = vector.extract_strided_slice %32 {offsets = [1, 0], sizes = [1, 256], strides = [1, 1]} : vector<8x256xf32> to vector<1x256xf32>
    %cst_42 = arith.constant 0.0584229901 : f32
    %109 = vector.broadcast %cst_42 : f32 to vector<1x256xf32>
    %110 = arith.mulf %109, %108 : vector<1x256xf32>
    %111 = arith.addf %107, %110 : vector<1x256xf32>
    %c7 = arith.constant 7 : index
    %c0_43 = arith.constant 0 : index
    %112 = vector.load %arg8[%c7, %c0_43] : memref<8x256xf32, #tpu.memory_space<vmem>>, vector<1x256xf32>
    tpu.vector_store %arg8[%c7, %c0_43], %111 {strides = array<i32>} : memref<8x256xf32, #tpu.memory_space<vmem>>, vector<1x256xf32>,
    %c0_44 = arith.constant 0 : index
    %c0_45 = arith.constant 0 : index
    %113 = vector.load %arg8[%c0_44, %c0_45] : memref<8x256xf32, #tpu.memory_space<vmem>>, vector<8x256xf32>
    %c32_i32 = arith.constant 32 : i32
    %114 = tpu.dynamic_rotate %113 by %c32_i32 dim 1 : vector<8x256xf32>, i32 -> vector<8x256xf32>
    %c0_46 = arith.constant 0 : index
    %c0_47 = arith.constant 0 : index
    %c0_48 = arith.constant 0 : index
    %115 = vector.load %arg5[%c0_46, %c0_47, %c0_48] : memref<5x1x256xf32, #tpu.memory_space<vmem>>, vector<1x1x256xf32>
    %116 = vector.shape_cast %115 : vector<1x1x256xf32> to vector<1x256xf32>
    %117 = vector.broadcast %116 : vector<1x256xf32> to vector<8x256xf32>
    %118 = arith.mulf %114, %117 : vector<8x256xf32>
    %c16_i32 = arith.constant 16 : i32
    %119 = tpu.dynamic_rotate %113 by %c16_i32 dim 1 : vector<8x256xf32>, i32 -> vector<8x256xf32>
    %c1_49 = arith.constant 1 : index
    %c0_50 = arith.constant 0 : index
    %c0_51 = arith.constant 0 : index
    %120 = vector.load %arg5[%c1_49, %c0_50, %c0_51] : memref<5x1x256xf32, #tpu.memory_space<vmem>>, vector<1x1x256xf32>
    %121 = vector.shape_cast %120 : vector<1x1x256xf32> to vector<1x256xf32>
    %122 = vector.broadcast %121 : vector<1x256xf32> to vector<8x256xf32>
    %123 = arith.mulf %119, %122 : vector<8x256xf32>
    %124 = arith.addf %118, %123 : vector<8x256xf32>
    %c2 = arith.constant 2 : index
    %c0_52 = arith.constant 0 : index
    %c0_53 = arith.constant 0 : index
    %125 = vector.load %arg5[%c2, %c0_52, %c0_53] : memref<5x1x256xf32, #tpu.memory_space<vmem>>, vector<1x1x256xf32>
    %126 = vector.shape_cast %125 : vector<1x1x256xf32> to vector<1x256xf32>
    %127 = vector.broadcast %126 : vector<1x256xf32> to vector<8x256xf32>
    %128 = arith.mulf %113, %127 : vector<8x256xf32>
    %129 = arith.addf %124, %128 : vector<8x256xf32>
    %c240_i32 = arith.constant 240 : i32
    %130 = tpu.dynamic_rotate %113 by %c240_i32 dim 1 : vector<8x256xf32>, i32 -> vector<8x256xf32>
    %c3 = arith.constant 3 : index
    %c0_54 = arith.constant 0 : index
    %c0_55 = arith.constant 0 : index
    %131 = vector.load %arg5[%c3, %c0_54, %c0_55] : memref<5x1x256xf32, #tpu.memory_space<vmem>>, vector<1x1x256xf32>
    %132 = vector.shape_cast %131 : vector<1x1x256xf32> to vector<1x256xf32>
    %133 = vector.broadcast %132 : vector<1x256xf32> to vector<8x256xf32>
    %134 = arith.mulf %130, %133 : vector<8x256xf32>
    %135 = arith.addf %129, %134 : vector<8x256xf32>
    %c224_i32 = arith.constant 224 : i32
    %136 = tpu.dynamic_rotate %113 by %c224_i32 dim 1 : vector<8x256xf32>, i32 -> vector<8x256xf32>
    %c4 = arith.constant 4 : index
    %c0_56 = arith.constant 0 : index
    %c0_57 = arith.constant 0 : index
    %137 = vector.load %arg5[%c4, %c0_56, %c0_57] : memref<5x1x256xf32, #tpu.memory_space<vmem>>, vector<1x1x256xf32>
    %138 = vector.shape_cast %137 : vector<1x1x256xf32> to vector<1x256xf32>
    %139 = vector.broadcast %138 : vector<1x256xf32> to vector<8x256xf32>
    %140 = arith.mulf %136, %139 : vector<8x256xf32>
    %141 = arith.addf %135, %140 : vector<8x256xf32>
    %c2_i32_58 = arith.constant 2 : i32
    %142 = tpu.dynamic_rotate %141 by %c2_i32_58 dim 1 : vector<8x256xf32>, i32 -> vector<8x256xf32>
    %c0_59 = arith.constant 0 : index
    %c0_60 = arith.constant 0 : index
    %c0_61 = arith.constant 0 : index
    %143 = vector.load %arg6[%c0_59, %c0_60, %c0_61] : memref<5x1x256xf32, #tpu.memory_space<vmem>>, vector<1x1x256xf32>
    %144 = vector.shape_cast %143 : vector<1x1x256xf32> to vector<1x256xf32>
    %145 = vector.broadcast %144 : vector<1x256xf32> to vector<8x256xf32>
    %146 = arith.mulf %142, %145 : vector<8x256xf32>
    %c1_i32_62 = arith.constant 1 : i32
    %147 = tpu.dynamic_rotate %141 by %c1_i32_62 dim 1 : vector<8x256xf32>, i32 -> vector<8x256xf32>
    %c1_63 = arith.constant 1 : index
    %c0_64 = arith.constant 0 : index
    %c0_65 = arith.constant 0 : index
    %148 = vector.load %arg6[%c1_63, %c0_64, %c0_65] : memref<5x1x256xf32, #tpu.memory_space<vmem>>, vector<1x1x256xf32>
    %149 = vector.shape_cast %148 : vector<1x1x256xf32> to vector<1x256xf32>
    %150 = vector.broadcast %149 : vector<1x256xf32> to vector<8x256xf32>
    %151 = arith.mulf %147, %150 : vector<8x256xf32>
    %152 = arith.addf %146, %151 : vector<8x256xf32>
    %c2_66 = arith.constant 2 : index
    %c0_67 = arith.constant 0 : index
    %c0_68 = arith.constant 0 : index
    %153 = vector.load %arg6[%c2_66, %c0_67, %c0_68] : memref<5x1x256xf32, #tpu.memory_space<vmem>>, vector<1x1x256xf32>
    %154 = vector.shape_cast %153 : vector<1x1x256xf32> to vector<1x256xf32>
    %155 = vector.broadcast %154 : vector<1x256xf32> to vector<8x256xf32>
    %156 = arith.mulf %141, %155 : vector<8x256xf32>
    %157 = arith.addf %152, %156 : vector<8x256xf32>
    %c255_i32 = arith.constant 255 : i32
    %158 = tpu.dynamic_rotate %141 by %c255_i32 dim 1 : vector<8x256xf32>, i32 -> vector<8x256xf32>
    %c3_69 = arith.constant 3 : index
    %c0_70 = arith.constant 0 : index
    %c0_71 = arith.constant 0 : index
    %159 = vector.load %arg6[%c3_69, %c0_70, %c0_71] : memref<5x1x256xf32, #tpu.memory_space<vmem>>, vector<1x1x256xf32>
    %160 = vector.shape_cast %159 : vector<1x1x256xf32> to vector<1x256xf32>
    %161 = vector.broadcast %160 : vector<1x256xf32> to vector<8x256xf32>
    %162 = arith.mulf %158, %161 : vector<8x256xf32>
    %163 = arith.addf %157, %162 : vector<8x256xf32>
    %c254_i32 = arith.constant 254 : i32
    %164 = tpu.dynamic_rotate %141 by %c254_i32 dim 1 : vector<8x256xf32>, i32 -> vector<8x256xf32>
    %c4_72 = arith.constant 4 : index
    %c0_73 = arith.constant 0 : index
    %c0_74 = arith.constant 0 : index
    %165 = vector.load %arg6[%c4_72, %c0_73, %c0_74] : memref<5x1x256xf32, #tpu.memory_space<vmem>>, vector<1x1x256xf32>
    %166 = vector.shape_cast %165 : vector<1x1x256xf32> to vector<1x256xf32>
    %167 = vector.broadcast %166 : vector<1x256xf32> to vector<8x256xf32>
    %168 = arith.mulf %164, %167 : vector<8x256xf32>
    %169 = arith.addf %163, %168 : vector<8x256xf32>
    %c0_75 = arith.constant 0 : index
    %c0_76 = arith.constant 0 : index
    %c0_77 = arith.constant 0 : index
    %170 = vector.load %arg7[%c0_75, %c0_76, %c0_77] : memref<1x8x256xf32, #tpu.memory_space<vmem>>, vector<1x8x256xf32>
    %171 = vector.shape_cast %170 : vector<1x8x256xf32> to vector<8x256xf32>
    %172 = vector.shape_cast %169 : vector<8x256xf32> to vector<1x8x256xf32>
    tpu.vector_store %arg7[%c0_75, %c0_76, %c0_77], %172 {strides = array<i32>} : memref<1x8x256xf32, #tpu.memory_space<vmem>>, vector<1x8x256xf32>,
    return
  }
  func.func @transform_0(%arg0: i32, %arg1: i32) -> (i32, i32, i32) {
    %c0_i32 = arith.constant 0 : i32
    %c0_i32_0 = arith.constant 0 : i32
    return %arg0, %arg1, %c0_i32 : i32, i32, i32
  }
  func.func @transform_1(%arg0: i32, %arg1: i32) -> (i32, i32, i32) {
    %c1_i32 = arith.constant 1 : i32
    %0 = arith.muli %arg1, %c1_i32 : i32
    %c1_i32_0 = arith.constant 1 : i32
    %1 = arith.subi %0, %c1_i32_0 : i32
    %c0_i32 = arith.constant 0 : i32
    %2 = arith.maxsi %1, %c0_i32 : i32
    %c0_i32_1 = arith.constant 0 : i32
    %c0_i32_2 = arith.constant 0 : i32
    return %arg0, %2, %c0_i32_1 : i32, i32, i32
  }
  func.func @transform_2(%arg0: i32, %arg1: i32) -> (i32, i32, i32) {
    %c1_i32 = arith.constant 1 : i32
    %0 = arith.addi %arg1, %c1_i32 : i32
    %c1_i32_0 = arith.constant 1 : i32
    %1 = arith.muli %0, %c1_i32_0 : i32
    %c0_i32 = arith.constant 0 : i32
    %2 = arith.minsi %1, %c0_i32 : i32
    %c0_i32_1 = arith.constant 0 : i32
    %c0_i32_2 = arith.constant 0 : i32
    return %arg0, %2, %c0_i32_1 : i32, i32, i32
  }
  func.func @transform_3(%arg0: i32, %arg1: i32) -> (i32, i32, i32) {
    %c0_i32 = arith.constant 0 : i32
    %c0_i32_0 = arith.constant 0 : i32
    %c0_i32_1 = arith.constant 0 : i32
    %c0_i32_2 = arith.constant 0 : i32
    return %c0_i32, %c0_i32_0, %c0_i32_1 : i32, i32, i32
  }
  func.func @transform_4(%arg0: i32, %arg1: i32) -> (i32, i32, i32) {
    %c0_i32 = arith.constant 0 : i32
    %c0_i32_0 = arith.constant 0 : i32
    %c0_i32_1 = arith.constant 0 : i32
    %c0_i32_2 = arith.constant 0 : i32
    return %c0_i32, %c0_i32_0, %c0_i32_1 : i32, i32, i32
  }
  func.func @transform_5(%arg0: i32, %arg1: i32) -> (i32, i32, i32) {
    %c0_i32 = arith.constant 0 : i32
    %c0_i32_0 = arith.constant 0 : i32
    return %arg0, %arg1, %c0_i32 : i32, i32, i32
  }
}

</mosaic_0001>

<llo_original>
// kernel: tpu_custom_call.1
$region0: #{tpu_custom_call.1}
  #allocation0 [shape = 'u32[]', space=smem, size = 0x4, offset = 0x4, fixed_abs, tag = 'smem constant byte address 0x4 - core index']
  #allocation1 [shape = 'u32[144,128]{1,0:T(1,128)}', space=vmem, size = 0x12000, scoped, tag = 'internal scratch']
  #allocation2 [shape = 'f32[8,256]{1,0:T(8,128)}', space=vmem, size = 0x2000, scoped, tag = 'scratch operand']
  %s0 = inlined_call_operand.hbm [shape: f32[2,8,256], index: 0, kind: input, shape index: {}]
  %s1 = inlined_call_operand.hbm [shape: f32[2,8,256], index: 1, kind: input, shape index: {}]
  %s2 = inlined_call_operand.hbm [shape: f32[2,8,256], index: 2, kind: input, shape index: {}]
  %s3 = inlined_call_operand.vmem [shape: f32[5,1,256], index: 3, kind: input, shape index: {}]
  %s4 = inlined_call_operand.hbm [shape: f32[5,1,256], index: 4, kind: input, shape index: {}]
  %s5 = inlined_call_operand.hbm [shape: f32[2,8,256], index: 5, kind: output, shape index: {}]
  %s6 = sld [smem:[#allocation0]]
  $region69: #{tpu_custom_call.1} parent=0
    _
  %s8 = ssub.s32 1, %s6
  %s9 = scalar_select 0, %s8, %s6
  $region1: #{tpu_custom_call.1} parent=0
    #allocation3 [shape = 'u8[16384]{0}', space=vmem, size = 0x4000, scoped, tag = 'input window, operand 0']
    #allocation4 [shape = 's32[2]{0}', space=sflag, size = 0x8, scoped, tag = 'scoped memory for tpu_custom_call.1']
    #allocation5 [shape = 's32[2]{0}', space=sflag, size = 0x8, scoped, tag = 'scoped memory for tpu_custom_call.1']
    #allocation6 [shape = 'u8[16384]{0}', space=vmem, size = 0x4000, scoped, tag = 'input window, operand 1']
    #allocation7 [shape = 's32[2]{0}', space=sflag, size = 0x8, scoped, tag = 'scoped memory for tpu_custom_call.1']
    #allocation8 [shape = 'u8[16384]{0}', space=vmem, size = 0x4000, scoped, tag = 'input window, operand 2']
    #allocation9 [shape = 'u8[5120]{0}', space=vmem, size = 0x1400, scoped, tag = 'input window, operand 4, single buffered']
    #allocation10 [shape = 's32[1]{0}', space=sflag, size = 0x4, scoped, tag = 'scoped memory for tpu_custom_call.1']
    #allocation11 [shape = 'u8[16384]{0}', space=vmem, size = 0x4000, scoped, tag = 'output window, operand 0']
    %10 = vsyncpa [#allocation4], 0
    %s11 = scalar_lea.sflag [#allocation4], 1
    %12 = vsyncpa %s11, 0
    %13 = vsyncpa [#allocation7], 0
    %s14 = scalar_lea.sflag [#allocation7], 1
    %15 = vsyncpa %s14, 0
    %16 = vsyncpa [#allocation10], 0
    %17 = vsyncpa [#allocation5], 0
    %s18 = scalar_lea.sflag [#allocation5], 1
    %19 = vsyncpa %s18, 0
    loop: start=0, step=1, limit=4
    $region2: #{tpu_custom_call.1} parent=1 // loop_pre_header
      _
    $region3: #{tpu_custom_call.1} parent=1 // loop_header
      %s21 = sphi 0, %s25
      %p22 = scmp.ge.s32.totalorder %s21, 4
      %s28 = sphi 0, %s40
      %s29 = sphi 0, %s36
      %s30 = sphi 0, %s28
      %s31 = sphi 0, %s29
      %s32 = sphi 0, %s30
      %s33 = sphi 0, %s31
      %s45 = sphi 0, %s47
      %s48 = sphi 0, %s45
      %s49 = sphi 0, %s48
      %s65 = sphi 0, %s49
      %s79 = sphi 0, %s81
      %s82 = sphi 0, %s79
      %s83 = sphi 0, %s82
      %s99 = sphi 0, %s83
      %s113 = sphi 0, %s115
      %s116 = sphi 0, %s113
      %s117 = sphi 0, %s116
      %s133 = sphi 0, %s117
      %s137 = sphi 0, %s137
      %s139 = sphi 0, %s137
      %s140 = sphi 0, %s139
      %s154 = sphi 0, %s140
      %s158 = sphi 0, %s158
      %s160 = sphi 0, %s158
      %s161 = sphi 0, %s160
      %s175 = sphi 0, %s161
      %s183 = sphi 0, %s185
      %s186 = sphi 0, %s183
      %s187 = sphi 0, %s186
      %s203 = sphi 0, %s187
    $region4: #{tpu_custom_call.1} parent=1 // loop_header_branch
      %24 = sbr.rel (%p22) target = $region8
    $region5: #{tpu_custom_call.1} parent=1 // loop_body
      %s26 = ssub.s32 %s21, 1
      %s27 = ssub.s32 %s21, 2
      %s34 = sadd.s32 1, %s29
      %p35 = scmp.ge.s32.totalorder %s34, 1
      %s36 = scalar_select %p35, 0, %s34
      %s37 = sadd.s32 1, %s28
      %s38 = scalar_select %p35, %s37, %s28
      %p39 = scmp.ge.s32.totalorder %s38, 2
      %s40 = scalar_select %p39, 0, %s38
      %s41 = ssub.s32 %s28, %s40
      %s42 = ssub.s32 %s29, %s36
      %s43 = sor.u32 %s41, %s42
      %p44 = scmp.eq.s32.totalorder %s43, 0
      %s46 = sadd.s32 %s45, 1
      %s47 = scalar_select %p44, %s45, %s46
      %p50 = pneg %p44
      %p51 = scmp.eq.s32.totalorder %s21, 1
      %p52 = por %p50, %p51
      %p53 = scmp.ne.s32.totalorder %s45, %s48
      %p54 = scmp.eq.s32.totalorder %s21, 0
      %p55 = por %p53, %p54
      %p56 = scmp.ne.s32.totalorder %s45, %s48
      %p57 = scmp.eq.s32.totalorder %s26, 1
      %p58 = por %p56, %p57
      %p59 = scmp.ne.s32.totalorder %s48, %s49
      %p60 = scmp.eq.s32.totalorder %s26, 0
      %p61 = por %p59, %p60
      %p62 = scmp.ne.s32.totalorder %s48, %s49
      %p63 = scmp.eq.s32.totalorder %s27, 1
      %p64 = por %p62, %p63
      %p66 = scmp.ne.s32.totalorder %s49, %s65
      %p67 = scmp.eq.s32.totalorder %s27, 0
      %p68 = por %p66, %p67
      %s69 = ssub.s32 %s29, 1
      %p70 = scmp.gt.s32.totalorder %s69, 0
      %s71 = scalar_select %p70, %s69, 0
      %s72 = ssub.s32 %s36, 1
      %p73 = scmp.gt.s32.totalorder %s72, 0
      %s74 = scalar_select %p73, %s72, 0
      %s75 = ssub.s32 %s28, %s40
      %s76 = ssub.s32 %s71, %s74
      %s77 = sor.u32 %s75, %s76
      %p78 = scmp.eq.s32.totalorder %s77, 0
      %s80 = sadd.s32 %s79, 1
      %s81 = scalar_select %p78, %s79, %s80
      %p84 = pneg %p78
      %p85 = scmp.eq.s32.totalorder %s21, 1
      %p86 = por %p84, %p85
      %p87 = scmp.ne.s32.totalorder %s79, %s82
      %p88 = scmp.eq.s32.totalorder %s21, 0
      %p89 = por %p87, %p88
      %p90 = scmp.ne.s32.totalorder %s79, %s82
      %p91 = scmp.eq.s32.totalorder %s26, 1
      %p92 = por %p90, %p91
      %p93 = scmp.ne.s32.totalorder %s82, %s83
      %p94 = scmp.eq.s32.totalorder %s26, 0
      %p95 = por %p93, %p94
      %p96 = scmp.ne.s32.totalorder %s82, %s83
      %p97 = scmp.eq.s32.totalorder %s27, 1
      %p98 = por %p96, %p97
      %p100 = scmp.ne.s32.totalorder %s83, %s99
      %p101 = scmp.eq.s32.totalorder %s27, 0
      %p102 = por %p100, %p101
      %s103 = sadd.s32 %s29, 1
      %p104 = scmp.lt.s32.totalorder %s103, 0
      %s105 = scalar_select %p104, %s103, 0
      %s106 = sadd.s32 %s36, 1
      %p107 = scmp.lt.s32.totalorder %s106, 0
      %s108 = scalar_select %p107, %s106, 0
      %s109 = ssub.s32 %s28, %s40
      %s110 = ssub.s32 %s105, %s108
      %s111 = sor.u32 %s109, %s110
      %p112 = scmp.eq.s32.totalorder %s111, 0
      %s114 = sadd.s32 %s113, 1
      %s115 = scalar_select %p112, %s113, %s114
      %p118 = pneg %p112
      %p119 = scmp.eq.s32.totalorder %s21, 1
      %p120 = por %p118, %p119
      %p121 = scmp.ne.s32.totalorder %s113, %s116
      %p122 = scmp.eq.s32.totalorder %s21, 0
      %p123 = por %p121, %p122
      %p124 = scmp.ne.s32.totalorder %s113, %s116
      %p125 = scmp.eq.s32.totalorder %s26, 1
      %p126 = por %p124, %p125
      %p127 = scmp.ne.s32.totalorder %s116, %s117
      %p128 = scmp.eq.s32.totalorder %s26, 0
      %p129 = por %p127, %p128
      %p130 = scmp.ne.s32.totalorder %s116, %s117
      %p131 = scmp.eq.s32.totalorder %s27, 1
      %p132 = por %p130, %p131
      %p134 = scmp.ne.s32.totalorder %s117, %s133
      %p135 = scmp.eq.s32.totalorder %s27, 0
      %p136 = por %p134, %p135
      %s138 = sadd.s32 %s137, 1
      %p141 = scmp.eq.s32.totalorder %s21, 1
      %p142 = scmp.ne.s32.totalorder %s137, %s139
      %p143 = scmp.eq.s32.totalorder %s21, 0
      %p144 = por %p142, %p143
      %p145 = scmp.ne.s32.totalorder %s137, %s139
      %p146 = scmp.eq.s32.totalorder %s26, 1
      %p147 = por %p145, %p146
      %p148 = scmp.ne.s32.totalorder %s139, %s140
      %p149 = scmp.eq.s32.totalorder %s26, 0
      %p150 = por %p148, %p149
      %p151 = scmp.ne.s32.totalorder %s139, %s140
      %p152 = scmp.eq.s32.totalorder %s27, 1
      %p153 = por %p151, %p152
      %p155 = scmp.ne.s32.totalorder %s140, %s154
      %p156 = scmp.eq.s32.totalorder %s27, 0
      %p157 = por %p155, %p156
      %s159 = sadd.s32 %s158, 1
      %p162 = scmp.eq.s32.totalorder %s21, 1
      %p163 = scmp.ne.s32.totalorder %s158, %s160
      %p164 = scmp.eq.s32.totalorder %s21, 0
      %p165 = por %p163, %p164
      %p166 = scmp.ne.s32.totalorder %s158, %s160
      %p167 = scmp.eq.s32.totalorder %s26, 1
      %p168 = por %p166, %p167
      %p169 = scmp.ne.s32.totalorder %s160, %s161
      %p170 = scmp.eq.s32.totalorder %s26, 0
      %p171 = por %p169, %p170
      %p172 = scmp.ne.s32.totalorder %s160, %s161
      %p173 = scmp.eq.s32.totalorder %s27, 1
      %p174 = por %p172, %p173
      %p176 = scmp.ne.s32.totalorder %s161, %s175
      %p177 = scmp.eq.s32.totalorder %s27, 0
      %p178 = por %p176, %p177
      %s179 = ssub.s32 %s28, %s40
      %s180 = ssub.s32 %s29, %s36
      %s181 = sor.u32 %s179, %s180
      %p182 = scmp.eq.s32.totalorder %s181, 0
      %s184 = sadd.s32 %s183, 1
      %s185 = scalar_select %p182, %s183, %s184
      %p188 = pneg %p182
      %p189 = scmp.eq.s32.totalorder %s21, 1
      %p190 = por %p188, %p189
      %p191 = scmp.ne.s32.totalorder %s183, %s186
      %p192 = scmp.eq.s32.totalorder %s21, 0
      %p193 = por %p191, %p192
      %p194 = scmp.ne.s32.totalorder %s183, %s186
      %p195 = scmp.eq.s32.totalorder %s26, 1
      %p196 = por %p194, %p195
      %p197 = scmp.ne.s32.totalorder %s186, %s187
      %p198 = scmp.eq.s32.totalorder %s26, 0
      %p199 = por %p197, %p198
      %p200 = scmp.ne.s32.totalorder %s186, %s187
      %p201 = scmp.eq.s32.totalorder %s27, 1
      %p202 = por %p200, %p201
      %p204 = scmp.ne.s32.totalorder %s187, %s203
      %p205 = scmp.eq.s32.totalorder %s27, 0
      %p206 = por %p204, %p205
      %p207 = scmp.le.s32.totalorder 1, %s21
      %p208 = scmp.lt.s32.totalorder %s21, 3
      %p209 = pnand %p207, %p208
      %p210 = pneg %p209
      // Predicated region
      $region9: #{tpu_custom_call.1} parent=5 // pred_check
        _
      $region10: #{tpu_custom_call.1} parent=5 // pred_check_branch
        %212 = sbr.rel (%p209) target = $region12
      $region11: #{tpu_custom_call.1} parent=5 // pred_region
        %s213 = ssub.s32 %s21, 1
        // Predicated region
        $region13: #{tpu_custom_call.1} parent=11 // pred_check
          %p214 = pneg %p150
        $region14: #{tpu_custom_call.1} parent=11 // pred_check_branch
          %216 = sbr.rel (%p214) target = $region16
        $region15: #{tpu_custom_call.1} parent=11 // pred_region
          _
        $region16: #{tpu_custom_call.1} parent=11 // pred_fallthru
          _
        // Predicated region
        $region17: #{tpu_custom_call.1} parent=11 // pred_check
          %p217 = pneg %p171
        $region18: #{tpu_custom_call.1} parent=11 // pred_check_branch
          %219 = sbr.rel (%p217) target = $region20
        $region19: #{tpu_custom_call.1} parent=11 // pred_region
          %s221 = ssub.s32 160, 160
          %222 = vsyncadd [#allocation10], %s221
          %s223 = sshll.u32 [#allocation9], 4
          %s224 = int_to_ptr.vmem [resolvable:$true] %s223
          %229 = dma.hbm_to_vmem [thread:$0]  %s4, 160, %s224, [#allocation10], 32, 32, 2
        $region20: #{tpu_custom_call.1} parent=11 // pred_fallthru
          _
      $region12: #{tpu_custom_call.1} parent=5 // pred_fallthru
        _
      %p230 = scmp.lt.s32.totalorder %s21, 2
      // Predicated region
      $region21: #{tpu_custom_call.1} parent=5 // pred_check
        %p231 = pneg %p230
      $region22: #{tpu_custom_call.1} parent=5 // pred_check_branch
        %233 = sbr.rel (%p231) target = $region24
      $region23: #{tpu_custom_call.1} parent=5 // pred_region
        // Predicated region
        $region25: #{tpu_custom_call.1} parent=23 // pred_check
          %p234 = pneg %p55
        $region26: #{tpu_custom_call.1} parent=23 // pred_check_branch
          %236 = sbr.rel (%p234) target = $region28
        $region27: #{tpu_custom_call.1} parent=23 // pred_region
          %s237 = sand.u32 %s45, 1
          %s238 = scalar_lea.sflag [#allocation4], %s237
          %s239 = sand.u32 %s45, 1
          %s240 = smul.addr %s239, 16
          %s241 = scalar_lea.vmem [#allocation3], %s240
          %s243 = ssub.s32 256, 256
          %244 = vsyncadd %s238, %s243
          %s245 = smul.addr %s29, 2
          %s246 = smul.addr %s28, 2
          %s247 = sadd.s32 %s245, %s246
          %s248 = smul.addr %s247, 128
          %s249 = scalar_lea.hbm %s0, %s248
          %s251 = sshll.u32 %s241, 4
          %s252 = int_to_ptr.vmem [resolvable:$true] %s251
          %254 = dma.hbm_to_vmem [thread:$0]  %s249, 256, %s252, %s238
        $region28: #{tpu_custom_call.1} parent=23 // pred_fallthru
          _
        // Predicated region
        $region29: #{tpu_custom_call.1} parent=23 // pred_check
          %p255 = pneg %p89
        $region30: #{tpu_custom_call.1} parent=23 // pred_check_branch
          %257 = sbr.rel (%p255) target = $region32
        $region31: #{tpu_custom_call.1} parent=23 // pred_region
          %s258 = sand.u32 %s21, 1
          %s259 = scalar_lea.sflag [#allocation7], %s258
          %s260 = sand.u32 %s79, 1
          %s261 = smul.addr %s260, 16
          %s262 = scalar_lea.vmem [#allocation6], %s261
          %s263 = ssub.s32 %s29, 1
          %p264 = scmp.gt.s32.totalorder %s263, 0
          %s265 = scalar_select %p264, %s263, 0
          %s267 = ssub.s32 256, 256
          %268 = vsyncadd %s259, %s267
          %s269 = smul.addr %s265, 2
          %s270 = smul.addr %s28, 2
          %s271 = sadd.s32 %s269, %s270
          %s272 = smul.addr %s271, 128
          %s273 = scalar_lea.hbm %s1, %s272
          %s275 = sshll.u32 %s262, 4
          %s276 = int_to_ptr.vmem [resolvable:$true] %s275
          %278 = dma.hbm_to_vmem [thread:$0]  %s273, 256, %s276, %s259
        $region32: #{tpu_custom_call.1} parent=23 // pred_fallthru
          _
        // Predicated region
        $region33: #{tpu_custom_call.1} parent=23 // pred_check
          %p279 = pneg %p123
        $region34: #{tpu_custom_call.1} parent=23 // pred_check_branch
          %281 = sbr.rel (%p279) target = $region36
        $region35: #{tpu_custom_call.1} parent=23 // pred_region
          %s282 = sand.u32 %s21, 1
          %s283 = scalar_lea.sflag [#allocation7], %s282
          %s284 = sand.u32 %s113, 1
          %s285 = smul.addr %s284, 16
          %s286 = scalar_lea.vmem [#allocation8], %s285
          %s287 = sadd.s32 %s29, 1
          %p288 = scmp.lt.s32.totalorder %s287, 0
          %s289 = scalar_select %p288, %s287, 0
          %s291 = ssub.s32 256, 256
          %292 = vsyncadd %s283, %s291
          %s293 = smul.addr %s289, 2
          %s294 = smul.addr %s28, 2
          %s295 = sadd.s32 %s293, %s294
          %s296 = smul.addr %s295, 128
          %s297 = scalar_lea.hbm %s2, %s296
          %s299 = sshll.u32 %s286, 4
          %s300 = int_to_ptr.vmem [resolvable:$true] %s299
          %302 = dma.hbm_to_vmem [thread:$0]  %s297, 256, %s300, %s283
        $region36: #{tpu_custom_call.1} parent=23 // pred_fallthru
          _
      $region24: #{tpu_custom_call.1} parent=5 // pred_fallthru
        _
      %p303 = scmp.le.s32.totalorder 1, %s21
      %p304 = scmp.lt.s32.totalorder %s21, 3
      %p305 = pnand %p303, %p304
      %p306 = pneg %p305
      // Predicated region
      $region37: #{tpu_custom_call.1} parent=5 // pred_check
        _
      $region38: #{tpu_custom_call.1} parent=5 // pred_check_branch
        %308 = sbr.rel (%p305) target = $region40
      $region39: #{tpu_custom_call.1} parent=5 // pred_region
        %s309 = ssub.s32 %s21, 1
        %s310 = sand.u32 %s48, 1
        %s311 = scalar_lea.sflag [#allocation4], %s310
        %s312 = sand.u32 %s48, 1
        %s313 = smul.addr %s312, 16
        %s314 = scalar_lea.vmem [#allocation3], %s313
        // Predicated region
        $region41: #{tpu_custom_call.1} parent=39 // pred_check
          %p315 = pneg %p61
        $region42: #{tpu_custom_call.1} parent=39 // pred_check_branch
          %317 = sbr.rel (%p315) target = $region44
        $region43: #{tpu_custom_call.1} parent=39 // pred_region
          %318 = dma.done %s311, 256
        $region44: #{tpu_custom_call.1} parent=39 // pred_fallthru
          _
        %s319 = sand.u32 %s26, 1
        %s320 = scalar_lea.sflag [#allocation7], %s319
        %s321 = sand.u32 %s82, 1
        %s322 = smul.addr %s321, 16
        %s323 = scalar_lea.vmem [#allocation6], %s322
        // Predicated region
        $region45: #{tpu_custom_call.1} parent=39 // pred_check
          %p324 = pneg %p95
        $region46: #{tpu_custom_call.1} parent=39 // pred_check_branch
          %326 = sbr.rel (%p324) target = $region48
        $region47: #{tpu_custom_call.1} parent=39 // pred_region
          %327 = dma.done %s320, 256
        $region48: #{tpu_custom_call.1} parent=39 // pred_fallthru
          _
        %s328 = sand.u32 %s26, 1
        %s329 = scalar_lea.sflag [#allocation7], %s328
        %s330 = sand.u32 %s116, 1
        %s331 = smul.addr %s330, 16
        %s332 = scalar_lea.vmem [#allocation8], %s331
        // Predicated region
        $region49: #{tpu_custom_call.1} parent=39 // pred_check
          %p333 = pneg %p129
        $region50: #{tpu_custom_call.1} parent=39 // pred_check_branch
          %335 = sbr.rel (%p333) target = $region52
        $region51: #{tpu_custom_call.1} parent=39 // pred_region
          %336 = dma.done %s329, 256
        $region52: #{tpu_custom_call.1} parent=39 // pred_fallthru
          _
        // Predicated region
        $region53: #{tpu_custom_call.1} parent=39 // pred_check
          %p337 = pneg %p171
        $region54: #{tpu_custom_call.1} parent=39 // pred_check_branch
          %339 = sbr.rel (%p337) target = $region56
        $region55: #{tpu_custom_call.1} parent=39 // pred_region
          %340 = dma.done [#allocation10], 160
        $region56: #{tpu_custom_call.1} parent=39 // pred_fallthru
          _
        %s341 = sand.u32 %s48, 1
        %s342 = scalar_lea.sflag [#allocation4], %s341
        %s343 = sand.u32 %s48, 1
        %s344 = smul.addr %s343, 16
        %s345 = scalar_lea.vmem [#allocation3], %s344
        %p346 = pneg %p61
        %p347 = pneg %p58
        %s348 = sand.u32 %s26, 1
        %s349 = scalar_lea.sflag [#allocation7], %s348
        %s350 = sand.u32 %s82, 1
        %s351 = smul.addr %s350, 16
        %s352 = scalar_lea.vmem [#allocation6], %s351
        %p353 = pneg %p95
        %p354 = pneg %p92
        %s355 = sand.u32 %s26, 1
        %s356 = scalar_lea.sflag [#allocation7], %s355
        %s357 = sand.u32 %s116, 1
        %s358 = smul.addr %s357, 16
        %s359 = scalar_lea.vmem [#allocation8], %s358
        %p360 = pneg %p129
        %p361 = pneg %p126
        %p362 = pneg %p150
        %p363 = pneg %p147
        %p364 = pneg %p171
        %p365 = pneg %p168
        %p366 = pneg %p199
        %p367 = pneg %p196
        %s368 = sand.u32 %s186, 1
        %s369 = scalar_lea.sflag [#allocation5], %s368
        %s370 = sand.u32 %s186, 1
        %s371 = smul.addr %s370, 16
        %s372 = scalar_lea.vmem [#allocation11], %s371
        %s373 = ssub.s32 %s31, 1
        %p374 = scmp.gt.s32.totalorder %s373, 0
        %s375 = scalar_select %p374, %s373, 0
        %s376 = sadd.s32 %s31, 1
        %p377 = scmp.lt.s32.totalorder %s376, 0
        %s378 = scalar_select %p377, %s376, 0
        %v379 = vld [vmem:[%s314] sm:$0xff]
        %v380 = vld [vmem:[%s314 + $0x8] sm:$0xff]
        %v381 = vrot.slane %v379, 6
        %v382 = vrot.slane %v380, 6
        %v383 = vmul.f32 %v381, 0.05842299
        %v384 = vmul.f32 %v382, 0.05842299
        %v385 = vrot.slane %v379, 7
        %v386 = vrot.slane %v380, 7
        %v387 = vmul.f32 %v385, 0.24210528
        %v388 = vmul.f32 %v386, 0.24210528
        %v389 = vadd.f32 %v383, %v387
        %v390 = vadd.f32 %v384, %v388
        %v391 = vmul.f32 %v379, 0.39894348
        %v392 = vmul.f32 %v380, 0.39894348
        %v393 = vadd.f32 %v389, %v391
        %v394 = vadd.f32 %v390, %v392
        %v395 = vrot.slane %v379, 1
        %v396 = vrot.slane %v380, 1
        %v397 = vmul.f32 %v395, 0.24210528
        %v398 = vmul.f32 %v396, 0.24210528
        %v399 = vadd.f32 %v393, %v397
        %v400 = vadd.f32 %v394, %v398
        %v401 = vrot.slane %v379, 2
        %v402 = vrot.slane %v380, 2
        %v403 = vmul.f32 %v401, 0.05842299
        %v404 = vmul.f32 %v402, 0.05842299
        %v405 = vadd.f32 %v399, %v403
        %v406 = vadd.f32 %v400, %v404
        %407 = vst [vmem:[#allocation2] sm:$0xff] %v405
        %408 = vst [vmem:[#allocation2 + $0x8] sm:$0xff] %v406
        %p409 = scmp.gt.s32.totalorder %s31, 0
        %s410 = scalar_select %p409, 1.0, 0.0
        %p411 = scmp.lt.s32.totalorder %s31, 0
        %s412 = scalar_select %p411, 1.0, 0.0
        %v413 = vld [vmem:[%s323] sm:$0xff]
        %v414 = vld [vmem:[%s323 + $0x8] sm:$0xff]
        %v415 = vstv %s410
        %v416 = vmul.f32 %v413, %v415
        %v417 = vmul.f32 %v414, %v415
        %v418 = vld [vmem:[%s332] sm:$0xff]
        %v419 = vld [vmem:[%s332 + $0x8] sm:$0xff]
        %v420 = vstv %s412
        %v421 = vmul.f32 %v418, %v420
        %v422 = vmul.f32 %v419, %v420
        %v423 = vmul.f32 %v416, 0.05842299
        %v424 = vmul.f32 %v417, 0.05842299
        %v425 = vmul.f32 %v416, 0.24210528
        %v426 = vmul.f32 %v417, 0.24210528
        %v429 = vrot.slane %v425, 1
        %v430 = vrot.slane %v426, 1
        %v433 = vadd.f32 %v423, %v429
        %v434 = vadd.f32 %v424, %v430
        %v437 = vrot.slane %v391, 2
        %v438 = vrot.slane %v392, 2
        %v441 = vadd.f32 %v433, %v437
        %v442 = vadd.f32 %v434, %v438
        %v443 = vmul.f32 %v379, 0.24210528
        %v444 = vmul.f32 %v380, 0.24210528
        %v447 = vrot.slane %v443, 3
        %v448 = vrot.slane %v444, 3
        %v451 = vadd.f32 %v441, %v447
        %v452 = vadd.f32 %v442, %v448
        %v453 = vmul.f32 %v379, 0.05842299
        %v454 = vmul.f32 %v380, 0.05842299
        %v457 = vrot.slane %v453, 4
        %v458 = vrot.slane %v454, 4
        %v461 = vadd.f32 %v451, %v457
        %v462 = vadd.f32 %v452, %v458
        %v465 = vcombine.high %v461, %v462
        %v467 = vunpack.c.l.s4 1966171168
        %v468 = vunpack.c.0.s8 %v467
        %v469 = vlaneseq
        %v470 = vshrl.u32 %v469, 7
        %v471 = vsub.s32 %v468, %v470
        %v472 = vrot.slane %v465, %v471
        %v474 = vunpack.c.l.s4 1966171168
        %v475 = vunpack.c.0.s8 %v474
        %v476 = vlaneseq
        %v477 = vshrl.u32 %v476, 7
        %v478 = vsub.s32 %v475, %v477
        %v479 = vrot.slane %v472, %v478
        %v480 = vcombine.high %v479, %v479
        %v482 = vlaneseq
        %vm483 = vcmp.ge.s32.totalorder %v482, 0
        %vm484 = vcmp.lt.s32.totalorder %v482, 256
        %vm485 = vmand %vm483, %vm484
        %486 = vst.msk [vmem:[#allocation2] ss:$8 sm:$0x3] %vm485, %v480
        %487 = vst.msk [vmem:[#allocation2] ss:$8 sm:$0x0] %vm485, %v480
        %v488 = vrot.slane %v443, 1
        %v489 = vrot.slane %v444, 1
        %v492 = vadd.f32 %v423, %v488
        %v493 = vadd.f32 %v424, %v489
        %v494 = vadd.f32 %v492, %v437
        %v495 = vadd.f32 %v493, %v438
        %v496 = vadd.f32 %v494, %v447
        %v497 = vadd.f32 %v495, %v448
        %v498 = vadd.f32 %v496, %v457
        %v499 = vadd.f32 %v497, %v458
        %v502 = vcombine.high %v498, %v499
        %v504 = vunpack.c.l.s4 1966171168
        %v505 = vunpack.c.0.s8 %v504
        %v506 = vlaneseq
        %v507 = vshrl.u32 %v506, 7
        %v508 = vsub.s32 %v505, %v507
        %v509 = vrot.slane %v502, %v508
        %v510 = vcombine.high %v509, %v509
        %v512 = vunpack.c.l.s4 1966171168
        %v513 = vunpack.c.0.s8 %v512
        %v514 = vlaneseq
        %v515 = vshrl.u32 %v514, 7
        %v516 = vsub.s32 %v513, %v515
        %v517 = vrot.slane %v510, %v516
        %v518 = vcombine.high %v517, %v517
        %s520 = scalar_lea.vmem [#allocation2], 1
        %521 = vst.msk [vmem:[%s520] ss:$8 sm:$0x3] %vm485, %v518
        %522 = vst.msk [vmem:[%s520] ss:$8 sm:$0x0] %vm485, %v518
        %v523 = vadd.f32 %v453, %v488
        %v524 = vadd.f32 %v454, %v489
        %v525 = vadd.f32 %v523, %v437
        %v526 = vadd.f32 %v524, %v438
        %v527 = vadd.f32 %v525, %v447
        %v528 = vadd.f32 %v526, %v448
        %v529 = vmul.f32 %v421, 0.05842299
        %v530 = vmul.f32 %v422, 0.05842299
        %v533 = vrot.slane %v529, 4
        %v534 = vrot.slane %v530, 4
        %v537 = vadd.f32 %v527, %v533
        %v538 = vadd.f32 %v528, %v534
        %v541 = vcombine.high %v537, %v538
        %v543 = vunpack.c.l.s4 1966171168
        %v544 = vunpack.c.0.s8 %v543
        %v545 = vlaneseq
        %v546 = vshrl.u32 %v545, 7
        %v547 = vsub.s32 %v544, %v546
        %v548 = vrot.slane %v541, %v547
        %v550 = vunpack.c.l.s4 1966171168
        %v551 = vunpack.c.0.s8 %v550
        %v552 = vlaneseq
        %v553 = vshrl.u32 %v552, 7
        %v554 = vsub.s32 %v551, %v553
        %v555 = vrot.slane %v548, %v554
        %s557 = scalar_lea.vmem [#allocation2], 6
        %558 = vst.msk [vmem:[%s557] ss:$8 sm:$0x3] %vm485, %v555
        %559 = vst.msk [vmem:[%s557] ss:$8 sm:$0x0] %vm485, %v555
        %v560 = vmul.f32 %v421, 0.24210528
        %v561 = vmul.f32 %v422, 0.24210528
        %v564 = vrot.slane %v560, 3
        %v565 = vrot.slane %v561, 3
        %v568 = vadd.f32 %v525, %v564
        %v569 = vadd.f32 %v526, %v565
        %v570 = vadd.f32 %v568, %v533
        %v571 = vadd.f32 %v569, %v534
        %v574 = vcombine.high %v570, %v571
        %v576 = vunpack.c.l.s4 1966171168
        %v577 = vunpack.c.0.s8 %v576
        %v578 = vlaneseq
        %v579 = vshrl.u32 %v578, 7
        %v580 = vsub.s32 %v577, %v579
        %v581 = vrot.slane %v574, %v580
        %v582 = vcombine.high %v581, %v581
        %v584 = vunpack.c.l.s4 1966171168
        %v585 = vunpack.c.0.s8 %v584
        %v586 = vlaneseq
        %v587 = vshrl.u32 %v586, 7
        %v588 = vsub.s32 %v585, %v587
        %v589 = vrot.slane %v582, %v588
        %s591 = scalar_lea.vmem [#allocation2], 7
        %592 = vst.msk [vmem:[%s591] ss:$8 sm:$0x3] %vm485, %v589
        %593 = vst.msk [vmem:[%s591] ss:$8 sm:$0x0] %vm485, %v589
        %v594 = vld [vmem:[#allocation2] sm:$0xff]
        %v595 = vld [vmem:[#allocation2 + $0x8] sm:$0xff]
        %596 = vrot.lane.b32.xlu0 %v594, 32
        %v597 = vpop.permute.xlu0 %596
        %598 = vrot.lane.b32.xlu0 %v595, 32
        %v599 = vpop.permute.xlu0 %598
        %v600 = vlaneseq
        %v601 = vand.u32 %v600, 127
        %vm602 = vcmp.lt.s32.totalorder %v601, 32
        %v603 = vsel %vm602, %v597, %v599
        %v604 = vsel %vm602, %v599, %v597
        %v605 = vld [vmem:[%s3] sm:$0x3]
        %v607 = vlaneseq
        %v608 = vshrl.u32 %v607, 7
        %v609 = vsub.s32 0, %v608
        %v610 = vrot.slane %v605, %v609
        %v611 = vlaneseq
        %v612 = vshrl.u32 %v611, 7
        %v613 = vsub.s32 1, %v612
        %v614 = vrot.slane %v605, %v613
        %v617 = vmul.f32 %v604, %v610
        %v618 = vmul.f32 %v603, %v614
        %619 = vrot.lane.b32.xlu0 %v594, 16
        %v620 = vpop.permute.xlu0 %619
        %621 = vrot.lane.b32.xlu0 %v595, 16
        %v622 = vpop.permute.xlu0 %621
        %vm623 = vcmp.lt.s32.totalorder %v601, 16
        %v624 = vsel %vm623, %v620, %v622
        %v625 = vsel %vm623, %v622, %v620
        %s626 = scalar_lea.vmem %s3, 2
        %v627 = vld [vmem:[%s626] sm:$0x3]
        %v629 = vlaneseq
        %v630 = vshrl.u32 %v629, 7
        %v631 = vsub.s32 0, %v630
        %v632 = vrot.slane %v627, %v631
        %v633 = vlaneseq
        %v634 = vshrl.u32 %v633, 7
        %v635 = vsub.s32 1, %v634
        %v636 = vrot.slane %v627, %v635
        %v639 = vmul.f32 %v625, %v632
        %v640 = vmul.f32 %v624, %v636
        %v641 = vadd.f32 %v617, %v639
        %v642 = vadd.f32 %v618, %v640
        %s643 = scalar_lea.vmem %s3, 4
        %v644 = vld [vmem:[%s643] sm:$0x3]
        %v646 = vlaneseq
        %v647 = vshrl.u32 %v646, 7
        %v648 = vsub.s32 0, %v647
        %v649 = vrot.slane %v644, %v648
        %v650 = vlaneseq
        %v651 = vshrl.u32 %v650, 7
        %v652 = vsub.s32 1, %v651
        %v653 = vrot.slane %v644, %v652
        %v656 = vmul.f32 %v594, %v649
        %v657 = vmul.f32 %v595, %v653
        %v658 = vadd.f32 %v641, %v656
        %v659 = vadd.f32 %v642, %v657
        %660 = vrot.lane.b32.xlu0 %v594, 112
        %v661 = vpop.permute.xlu0 %660
        %662 = vrot.lane.b32.xlu0 %v595, 112
        %v663 = vpop.permute.xlu0 %662
        %vm664 = vcmp.lt.s32.totalorder %v601, 112
        %v665 = vsel %vm664, %v661, %v663
        %v666 = vsel %vm664, %v663, %v661
        %s667 = scalar_lea.vmem %s3, 6
        %v668 = vld [vmem:[%s667] sm:$0x3]
        %v670 = vlaneseq
        %v671 = vshrl.u32 %v670, 7
        %v672 = vsub.s32 0, %v671
        %v673 = vrot.slane %v668, %v672
        %v674 = vlaneseq
        %v675 = vshrl.u32 %v674, 7
        %v676 = vsub.s32 1, %v675
        %v677 = vrot.slane %v668, %v676
        %v680 = vmul.f32 %v665, %v673
        %v681 = vmul.f32 %v666, %v677
        %v682 = vadd.f32 %v658, %v680
        %v683 = vadd.f32 %v659, %v681
        %684 = vrot.lane.b32.xlu0 %v594, 96
        %v685 = vpop.permute.xlu0 %684
        %686 = vrot.lane.b32.xlu0 %v595, 96
        %v687 = vpop.permute.xlu0 %686
        %vm688 = vcmp.lt.s32.totalorder %v601, 96
        %v689 = vsel %vm688, %v685, %v687
        %v690 = vsel %vm688, %v687, %v685
        %s691 = scalar_lea.vmem %s3, 8
        %v692 = vld [vmem:[%s691] sm:$0x3]
        %v694 = vlaneseq
        %v695 = vshrl.u32 %v694, 7
        %v696 = vsub.s32 0, %v695
        %v697 = vrot.slane %v692, %v696
        %v698 = vlaneseq
        %v699 = vshrl.u32 %v698, 7
        %v700 = vsub.s32 1, %v699
        %v701 = vrot.slane %v692, %v700
        %v704 = vmul.f32 %v689, %v697
        %v705 = vmul.f32 %v690, %v701
        %v706 = vadd.f32 %v682, %v704
        %v707 = vadd.f32 %v683, %v705
        %708 = vrot.lane.b32.xlu0 %v706, 2
        %v709 = vpop.permute.xlu0 %708
        %710 = vrot.lane.b32.xlu0 %v707, 2
        %v711 = vpop.permute.xlu0 %710
        %vm712 = vcmp.lt.s32.totalorder %v601, 2
        %v713 = vsel %vm712, %v709, %v711
        %v714 = vsel %vm712, %v711, %v709
        %v715 = vld [vmem:[#allocation9] sm:$0x3]
        %v717 = vlaneseq
        %v718 = vshrl.u32 %v717, 7
        %v719 = vsub.s32 0, %v718
        %v720 = vrot.slane %v715, %v719
        %v721 = vlaneseq
        %v722 = vshrl.u32 %v721, 7
        %v723 = vsub.s32 1, %v722
        %v724 = vrot.slane %v715, %v723
        %v727 = vmul.f32 %v714, %v720
        %v728 = vmul.f32 %v713, %v724
        %729 = vrot.lane.b32.xlu0 %v706, 1
        %v730 = vpop.permute.xlu0 %729
        %731 = vrot.lane.b32.xlu0 %v707, 1
        %v732 = vpop.permute.xlu0 %731
        %vm733 = vcmp.lt.s32.totalorder %v601, 1
        %v734 = vsel %vm733, %v730, %v732
        %v735 = vsel %vm733, %v732, %v730
        %s736 = scalar_lea.vmem [#allocation9], 2
        %v737 = vld [vmem:[%s736] sm:$0x3]
        %v739 = vlaneseq
        %v740 = vshrl.u32 %v739, 7
        %v741 = vsub.s32 0, %v740
        %v742 = vrot.slane %v737, %v741
        %v743 = vlaneseq
        %v744 = vshrl.u32 %v743, 7
        %v745 = vsub.s32 1, %v744
        %v746 = vrot.slane %v737, %v745
        %v749 = vmul.f32 %v735, %v742
        %v750 = vmul.f32 %v734, %v746
        %v751 = vadd.f32 %v727, %v749
        %v752 = vadd.f32 %v728, %v750
        %s753 = scalar_lea.vmem [#allocation9], 4
        %v754 = vld [vmem:[%s753] sm:$0x3]
        %v756 = vlaneseq
        %v757 = vshrl.u32 %v756, 7
        %v758 = vsub.s32 0, %v757
        %v759 = vrot.slane %v754, %v758
        %v760 = vlaneseq
        %v761 = vshrl.u32 %v760, 7
        %v762 = vsub.s32 1, %v761
        %v763 = vrot.slane %v754, %v762
        %v766 = vmul.f32 %v706, %v759
        %v767 = vmul.f32 %v707, %v763
        %v768 = vadd.f32 %v751, %v766
        %v769 = vadd.f32 %v752, %v767
        %770 = vrot.lane.b32.xlu0 %v706, 127
        %v771 = vpop.permute.xlu0 %770
        %772 = vrot.lane.b32.xlu0 %v707, 127
        %v773 = vpop.permute.xlu0 %772
        %vm774 = vcmp.lt.s32.totalorder %v601, 127
        %v775 = vsel %vm774, %v771, %v773
        %v776 = vsel %vm774, %v773, %v771
        %s777 = scalar_lea.vmem [#allocation9], 6
        %v778 = vld [vmem:[%s777] sm:$0x3]
        %v780 = vlaneseq
        %v781 = vshrl.u32 %v780, 7
        %v782 = vsub.s32 0, %v781
        %v783 = vrot.slane %v778, %v782
        %v784 = vlaneseq
        %v785 = vshrl.u32 %v784, 7
        %v786 = vsub.s32 1, %v785
        %v787 = vrot.slane %v778, %v786
        %v790 = vmul.f32 %v775, %v783
        %v791 = vmul.f32 %v776, %v787
        %v792 = vadd.f32 %v768, %v790
        %v793 = vadd.f32 %v769, %v791
        %794 = vrot.lane.b32.xlu0 %v706, 126
        %v795 = vpop.permute.xlu0 %794
        %796 = vrot.lane.b32.xlu0 %v707, 126
        %v797 = vpop.permute.xlu0 %796
        %vm798 = vcmp.lt.s32.totalorder %v601, 126
        %v799 = vsel %vm798, %v795, %v797
        %v800 = vsel %vm798, %v797, %v795
        %s801 = scalar_lea.vmem [#allocation9], 8
        %v802 = vld [vmem:[%s801] sm:$0x3]
        %v804 = vlaneseq
        %v805 = vshrl.u32 %v804, 7
        %v806 = vsub.s32 0, %v805
        %v807 = vrot.slane %v802, %v806
        %v808 = vlaneseq
        %v809 = vshrl.u32 %v808, 7
        %v810 = vsub.s32 1, %v809
        %v811 = vrot.slane %v802, %v810
        %v814 = vmul.f32 %v799, %v807
        %v815 = vmul.f32 %v800, %v811
        %v816 = vadd.f32 %v792, %v814
        %v817 = vadd.f32 %v793, %v815
        %818 = vst [vmem:[%s372] sm:$0xff] %v816
        %819 = vst [vmem:[%s372 + $0x8] sm:$0xff] %v817
        %s820 = sand.u32 %s186, 1
        %s821 = scalar_lea.sflag [#allocation5], %s820
        %s822 = sand.u32 %s186, 1
        %s823 = smul.addr %s822, 16
        %s824 = scalar_lea.vmem [#allocation11], %s823
        // Predicated region
        $region57: #{tpu_custom_call.1} parent=39 // pred_check
          %p825 = pneg %p196
        $region58: #{tpu_custom_call.1} parent=39 // pred_check_branch
          %827 = sbr.rel (%p825) target = $region60
        $region59: #{tpu_custom_call.1} parent=39 // pred_region
          %s829 = ssub.s32 256, 256
          %830 = vsyncadd %s821, %s829
          %s831 = smul.addr %s31, 2
          %s832 = smul.addr %s30, 2
          %s833 = sadd.s32 %s831, %s832
          %s834 = smul.addr %s833, 128
          %s835 = scalar_lea.hbm %s5, %s834
          %s837 = sshll.u32 %s824, 4
          %s838 = int_to_ptr.vmem [resolvable:$true] %s837
          %840 = dma.vmem_to_hbm [thread:$0]  %s838, 256, %s835, %s821
        $region60: #{tpu_custom_call.1} parent=39 // pred_fallthru
          _
      $region40: #{tpu_custom_call.1} parent=5 // pred_fallthru
        _
      %p841 = scmp.le.s32.totalorder 2, %s21
      // Predicated region
      $region61: #{tpu_custom_call.1} parent=5 // pred_check
        %p842 = pneg %p841
      $region62: #{tpu_custom_call.1} parent=5 // pred_check_branch
        %844 = sbr.rel (%p842) target = $region64
      $region63: #{tpu_custom_call.1} parent=5 // pred_region
        %s845 = ssub.s32 %s21, 2
        // Predicated region
        $region65: #{tpu_custom_call.1} parent=63 // pred_check
          %p846 = pneg %p202
        $region66: #{tpu_custom_call.1} parent=63 // pred_check_branch
          %848 = sbr.rel (%p846) target = $region68
        $region67: #{tpu_custom_call.1} parent=63 // pred_region
          %s849 = sand.u32 %s187, 1
          %s850 = scalar_lea.sflag [#allocation5], %s849
          %s851 = sand.u32 %s187, 1
          %s852 = smul.addr %s851, 16
          %s853 = scalar_lea.vmem [#allocation11], %s852
          %854 = dma.done %s850, 256
        $region68: #{tpu_custom_call.1} parent=63 // pred_fallthru
          _
      $region64: #{tpu_custom_call.1} parent=5 // pred_fallthru
        _
    $region6: #{tpu_custom_call.1} parent=1 // loop_footer
      %s25 = sadd.s32 1, %s21
    $region7: #{tpu_custom_call.1} parent=1 // loop_footer_branch
      %20 = sbr.rel target = $region3
    $region8: #{tpu_custom_call.1} parent=1 // loop_exit
      _
    %855 = vsyncpa [#allocation4], 1
    %s856 = scalar_lea.sflag [#allocation4], 1
    %857 = vsyncpa %s856, 1
    %858 = vsyncpa [#allocation7], 1
    %s859 = scalar_lea.sflag [#allocation7], 1
    %860 = vsyncpa %s859, 1
    %861 = vsyncpa [#allocation10], 1
    %862 = vsyncpa [#allocation5], 1
    %s863 = scalar_lea.sflag [#allocation5], 1
    %864 = vsyncpa %s863, 1

</llo_original>
